<compile_context>
chip_gen: v7x
topology: tpu7x:2x2x1
jax: 0.10.0
libtpu: 0.0.40
codegen_flags: <defaults>
</compile_context>

<pallas_src>
import functools

import jax
import jax.numpy as jnp
from jax.experimental import pallas as pl
from jax.experimental.pallas import tpu as pltpu


def layer_norm_kernel(x_ref, g_ref, b_ref, o_ref, *, eps):
    # x_ref: (tile_rows, hidden) tile; g_ref/b_ref: (1, hidden) resident params.
    x = x_ref[...].astype(jnp.float32)
    # Fused single pass: E[x] and E[x^2] from one read of the tile.
    mean = jnp.mean(x, axis=-1, keepdims=True)
    mean_sq = jnp.mean(x * x, axis=-1, keepdims=True)
    var = jnp.maximum(mean_sq - mean * mean, 0.0)
    inv = jax.lax.rsqrt(var + eps)  # EUP slot
    gamma = g_ref[...].astype(jnp.float32)
    beta = b_ref[...].astype(jnp.float32)
    o_ref[...] = ((x - mean) * inv * gamma + beta).astype(o_ref.dtype)


def _sublane_multiple(dtype):
    return {4: 8, 2: 16, 1: 32}.get(jnp.dtype(dtype).itemsize, 8)


def _round_up(x, m):
    return ((x + m - 1) // m) * m


def _row_working_bytes(hidden, dtype):
    """VMEM bytes one tile row really costs: 2x double-buffered input + 2x
    double-buffered output (input dtype) + ~3 full-tile f32 intermediates."""
    itemsize = jnp.dtype(dtype).itemsize
    return max(1, hidden) * (4 * itemsize + 3 * 4)


def _vmem_budget_bytes():
    """Per-chip budget for one tile's working set (conservative)."""
    cap = 64 * 1024 * 1024  # assume the smallest (v7x-class) if query fails
    try:
        cap = int(getattr(pltpu.get_tpu_info(), "vmem_capacity_bytes", cap))
    except Exception:
        pass
    if cap <= 64 * 1024 * 1024:      # v7x-class: 64 MiB VMEM per TensorCore
        return 20 * 1024 * 1024
    return 26 * 1024 * 1024          # v5e/v6e: 128 MiB physical VMEM


def _pick_tile_rows(rows, hidden, dtype, budget_bytes, requested=None,
                    min_steps=8):
    """Sublane-aligned row tile whose f32 working set fits `budget_bytes`.

    When auto-sizing, also caps the tile so the grid keeps >= `min_steps`
    steps (>= min_steps//2 per TensorCore under v7x megacore) whenever the
    slab is large enough, preserving DMA/compute overlap on both cores.
    """
    sub = _sublane_multiple(dtype)
    row_bytes = _row_working_bytes(hidden, dtype)
    fit = max(sub, (budget_bytes // row_bytes) // sub * sub)
    if requested is not None:
        t = max(sub, _round_up(int(requested), sub))
        t = min(t, fit)
    else:
        t = fit
        if rows >= min_steps * sub:
            t = min(t, max(sub, (rows // min_steps) // sub * sub))
    if t >= rows:
        return max(rows, 1)  # single block == full array dim (always legal)
    return t


def layer_norm(x, weight, bias, *, eps=1e-5, tile_rows=None):
    """LayerNorm over the last dim of x. weight/bias have shape (hidden,)."""
    orig_shape = x.shape
    hidden = orig_shape[-1]
    rows = 1
    for d in orig_shape[:-1]:
        rows *= d

    budget = _vmem_budget_bytes()
    tile_rows = _pick_tile_rows(rows, hidden, x.dtype, budget, tile_rows)

    x2 = x.reshape(rows, hidden)          # collapse of leading dims: no copy
    w2 = weight.reshape(1, hidden)
    b2 = bias.reshape(1, hidden)

    grid = (pl.cdiv(rows, tile_rows),)
    itemsize = jnp.dtype(x.dtype).itemsize
    cost = pl.CostEstimate(
        flops=8 * rows * hidden,
        transcendentals=rows,
        bytes_accessed=(2 * rows * hidden + 2 * hidden) * itemsize,
    )

    # Footprint-derived scoped-VMEM limit, capped at 32 MiB (v7x-safe); still
    # overrides the 16/32 MiB scoped defaults on v5e/v6e when needed.
    tile_bytes = tile_rows * _row_working_bytes(hidden, x.dtype)
    param_bytes = 4 * hidden * itemsize
    vmem_limit = min(
        32 * 1024 * 1024,
        max(8 * 1024 * 1024, tile_bytes + param_bytes + 4 * 1024 * 1024),
    )

    out2 = pl.pallas_call(
        functools.partial(layer_norm_kernel, eps=eps),
        out_shape=jax.ShapeDtypeStruct((rows, hidden), x.dtype),
        grid_spec=pltpu.PrefetchScalarGridSpec(
            num_scalar_prefetch=0,
            grid=grid,
            in_specs=[
                # NOTE: pipeline_mode=pl.Buffered(3) on x is a cheap sweep if
                # per-step DMA turns out still partially exposed at this tile.
                pl.BlockSpec((tile_rows, hidden), lambda i: (i, 0)),
                pl.BlockSpec((1, hidden), lambda i: (0, 0)),
                pl.BlockSpec((1, hidden), lambda i: (0, 0)),
            ],
            out_specs=pl.BlockSpec((tile_rows, hidden), lambda i: (i, 0)),
        ),
        compiler_params=pltpu.CompilerParams(
            dimension_semantics=("parallel",),
            vmem_limit_bytes=vmem_limit,
        ),
        cost_estimate=cost,
    )(x2, w2, b2)

    return out2.reshape(orig_shape)


def layer_norm_ref(x, weight, bias, eps=1e-5):
    xf = x.astype(jnp.float32)
    mean = jnp.mean(xf, axis=-1, keepdims=True)
    var = jnp.mean((xf - mean) ** 2, axis=-1, keepdims=True)
    y = (xf - mean) * jax.lax.rsqrt(var + eps)
    return (y * weight + bias).astype(x.dtype)


if __name__ == "__main__":
    batch, seq, hidden = 2, 8, 32
    key = jax.random.PRNGKey(0)
    kx, kw, kb = jax.random.split(key, 3)

    x = jax.random.normal(kx, (batch, seq, hidden), dtype=jnp.float32)
    # nn.LayerNorm defaults are ones/zeros; perturb so scale/shift are exercised.
    weight = jnp.ones((hidden,), jnp.float32) + 0.1 * jax.random.normal(
        kw, (hidden,), dtype=jnp.float32
    )
    bias = 0.1 * jax.random.normal(kb, (hidden,), dtype=jnp.float32)

    out = layer_norm(x, weight, bias, eps=1e-5)
    out = jax.block_until_ready(out)

    ref = layer_norm_ref(x, weight, bias, eps=1e-5)
    assert out.shape == x.shape and out.dtype == x.dtype
    assert jnp.allclose(out, ref, atol=1e-5, rtol=1e-5)

    # Non-divisible row count, single whole-slab block.
    x_odd = jax.random.normal(kx, (3, 5, hidden), dtype=jnp.float32)
    out_odd = jax.block_until_ready(layer_norm(x_odd, weight, bias, eps=1e-5))
    assert jnp.allclose(
        out_odd, layer_norm_ref(x_odd, weight, bias, eps=1e-5),
        atol=1e-5, rtol=1e-5
    )

    # Non-divisible rows with an explicit small tile -> exercises the masked
    # partial last grid step (no wrapper padding / slicing anymore).
    x_rag = jax.random.normal(kb, (3, 7, hidden), dtype=jnp.float32)
    out_rag = jax.block_until_ready(
        layer_norm(x_rag, weight, bias, eps=1e-5, tile_rows=8)
    )
    assert jnp.allclose(
        out_rag, layer_norm_ref(x_rag, weight, bias, eps=1e-5),
        atol=1e-5, rtol=1e-5
    )
    print("KERNEL_OK")
</pallas_src>

<mosaic_0001>
module attributes {stable_mosaic.version = 11 : i64} {
  func.func @layer_norm_kernel(%arg0: i32, %arg1: memref<16x32xf32, #tpu.memory_space<vmem>>, %arg2: memref<1x32xf32, #tpu.memory_space<vmem>>, %arg3: memref<1x32xf32, #tpu.memory_space<vmem>>, %arg4: memref<16x32xf32, #tpu.memory_space<vmem>>) attributes {dimension_semantics = [#tpu.dimension_semantics<parallel>], iteration_bounds = array<i64: 1>, scalar_prefetch = 0 : i64, scratch_operands = 0 : i64, tpu.core_type = #tpu.core_type<tc>, window_params = [{transform_indices = @transform_0, window_bounds = array<i64: 16, 32>}, {pipeline_mode = #tpu.pipeline_mode<synchronous>, transform_indices = @transform_1, window_bounds = array<i64: 1, 32>}, {pipeline_mode = #tpu.pipeline_mode<synchronous>, transform_indices = @transform_2, window_bounds = array<i64: 1, 32>}, {transform_indices = @transform_3, window_bounds = array<i64: 16, 32>}]} {
    %c0 = arith.constant 0 : index
    %c0_0 = arith.constant 0 : index
    %0 = vector.load %arg1[%c0, %c0_0] : memref<16x32xf32, #tpu.memory_space<vmem>>, vector<16x32xf32>
    %cst = arith.constant dense<0.000000e+00> : vector<16xf32>
    %1 = vector.multi_reduction <add>, %0, %cst [1] : vector<16x32xf32> to vector<16xf32>
    %2 = vector.shape_cast %1 : vector<16xf32> to vector<16x1xf32>
    %cst_1 = arith.constant 3.200000e+01 : f32
    %3 = vector.broadcast %cst_1 : f32 to vector<16x1xf32>
    %4 = arith.divf %2, %3 : vector<16x1xf32>
    %5 = arith.mulf %0, %0 : vector<16x32xf32>
    %cst_2 = arith.constant dense<0.000000e+00> : vector<16xf32>
    %6 = vector.multi_reduction <add>, %5, %cst_2 [1] : vector<16x32xf32> to vector<16xf32>
    %7 = vector.shape_cast %6 : vector<16xf32> to vector<16x1xf32>
    %cst_3 = arith.constant 3.200000e+01 : f32
    %8 = vector.broadcast %cst_3 : f32 to vector<16x1xf32>
    %9 = arith.divf %7, %8 : vector<16x1xf32>
    %10 = arith.mulf %4, %4 : vector<16x1xf32>
    %11 = arith.subf %9, %10 : vector<16x1xf32>
    %cst_4 = arith.constant 0.000000e+00 : f32
    %12 = vector.broadcast %cst_4 : f32 to vector<16x1xf32>
    %13 = arith.maximumf %11, %12 : vector<16x1xf32>
    %cst_5 = arith.constant 9.99999974E-6 : f32
    %14 = vector.broadcast %cst_5 : f32 to vector<16x1xf32>
    %15 = arith.addf %13, %14 : vector<16x1xf32>
    %16 = math.rsqrt %15 : vector<16x1xf32>
    %c0_6 = arith.constant 0 : index
    %c0_7 = arith.constant 0 : index
    %17 = vector.load %arg2[%c0_6, %c0_7] : memref<1x32xf32, #tpu.memory_space<vmem>>, vector<1x32xf32>
    %c0_8 = arith.constant 0 : index
    %c0_9 = arith.constant 0 : index
    %18 = vector.load %arg3[%c0_8, %c0_9] : memref<1x32xf32, #tpu.memory_space<vmem>>, vector<1x32xf32>
    %19 = vector.broadcast %4 : vector<16x1xf32> to vector<16x32xf32>
    %20 = arith.subf %0, %19 : vector<16x32xf32>
    %21 = vector.broadcast %16 : vector<16x1xf32> to vector<16x32xf32>
    %22 = arith.mulf %20, %21 : vector<16x32xf32>
    %23 = vector.broadcast %17 : vector<1x32xf32> to vector<16x32xf32>
    %24 = arith.mulf %22, %23 : vector<16x32xf32>
    %25 = vector.broadcast %18 : vector<1x32xf32> to vector<16x32xf32>
    %26 = arith.addf %24, %25 : vector<16x32xf32>
    %c0_10 = arith.constant 0 : index
    %c0_11 = arith.constant 0 : index
    %27 = vector.load %arg4[%c0_10, %c0_11] : memref<16x32xf32, #tpu.memory_space<vmem>>, vector<16x32xf32>
    tpu.vector_store %arg4[%c0_10, %c0_11], %26 {strides = array<i32>} : memref<16x32xf32, #tpu.memory_space<vmem>>, vector<16x32xf32>,
    return
  }
  func.func @transform_0(%arg0: i32) -> (i32, i32) {
    %c0_i32 = arith.constant 0 : i32
    %c0_i32_0 = arith.constant 0 : i32
    return %arg0, %c0_i32 : i32, i32
  }
  func.func @transform_1(%arg0: i32) -> (i32, i32) {
    %c0_i32 = arith.constant 0 : i32
    %c0_i32_0 = arith.constant 0 : i32
    %c0_i32_1 = arith.constant 0 : i32
    return %c0_i32, %c0_i32_0 : i32, i32
  }
  func.func @transform_2(%arg0: i32) -> (i32, i32) {
    %c0_i32 = arith.constant 0 : i32
    %c0_i32_0 = arith.constant 0 : i32
    %c0_i32_1 = arith.constant 0 : i32
    return %c0_i32, %c0_i32_0 : i32, i32
  }
  func.func @transform_3(%arg0: i32) -> (i32, i32) {
    %c0_i32 = arith.constant 0 : i32
    %c0_i32_0 = arith.constant 0 : i32
    return %arg0, %c0_i32 : i32, i32
  }
}

</mosaic_0001>

<llo_original>
// kernel: tpu_custom_call.1
$region0: #{tpu_custom_call.1}
  #allocation0 [shape = 'u32[]', space=smem, size = 0x4, offset = 0x4, fixed_abs, tag = 'smem constant byte address 0x4 - core index']
  #allocation1 [shape = 'u32[144,128]{1,0:T(1,128)}', space=vmem, size = 0x12000, scoped, tag = 'internal scratch']
  %s0 = inlined_call_operand.hbm [shape: f32[16,32], index: 0, kind: input, shape index: {}]
  %s1 = inlined_call_operand.vmem [shape: f32[1,32], index: 1, kind: input, shape index: {}]
  %s2 = inlined_call_operand.vmem [shape: f32[1,32], index: 2, kind: input, shape index: {}]
  %s3 = inlined_call_operand.hbm [shape: f32[16,32], index: 3, kind: output, shape index: {}]
  %s4 = sld [smem:[#allocation0]]
  $region26: #{tpu_custom_call.1} parent=0
    _
  %s6 = ssub.s32 1, %s4
  %s7 = scalar_select 0, %s6, %s4
  $region1: #{tpu_custom_call.1} parent=0
    #allocation2 [shape = 'u8[8192]{0}', space=vmem, size = 0x2000, scoped, tag = 'input window, operand 0, single buffered']
    #allocation3 [shape = 's32[1]{0}', space=sflag, size = 0x4, scoped, tag = 'scoped memory for tpu_custom_call.1']
    #allocation4 [shape = 's32[1]{0}', space=sflag, size = 0x4, scoped, tag = 'scoped memory for tpu_custom_call.1']
    #allocation5 [shape = 'u8[8192]{0}', space=vmem, size = 0x2000, scoped, tag = 'output window, operand 0, single buffered']
    %8 = vsyncpa [#allocation3], 0
    %9 = vsyncpa [#allocation4], 0
    // Predicated region
    $region2: #{tpu_custom_call.1} parent=1 // pred_check
      _
    $region3: #{tpu_custom_call.1} parent=1 // pred_check_branch
      %11 = sbr.rel (0) target = $region5
    $region4: #{tpu_custom_call.1} parent=1 // pred_region
      %s13 = ssub.s32 256, 256
      %14 = vsyncadd [#allocation3], %s13
      %s15 = sshll.u32 [#allocation2], 4
      %s16 = int_to_ptr.vmem [resolvable:$true] %s15
      %21 = dma.hbm_to_vmem [thread:$0]  %s0, 256, %s16, [#allocation3], 128, 128, 8
    $region5: #{tpu_custom_call.1} parent=1 // pred_fallthru
      _
    // Predicated region
    $region6: #{tpu_custom_call.1} parent=1 // pred_check
      _
    $region7: #{tpu_custom_call.1} parent=1 // pred_check_branch
      %23 = sbr.rel (0) target = $region9
    $region8: #{tpu_custom_call.1} parent=1 // pred_region
      _
    $region9: #{tpu_custom_call.1} parent=1 // pred_fallthru
      _
    // Predicated region
    $region10: #{tpu_custom_call.1} parent=1 // pred_check
      _
    $region11: #{tpu_custom_call.1} parent=1 // pred_check_branch
      %25 = sbr.rel (0) target = $region13
    $region12: #{tpu_custom_call.1} parent=1 // pred_region
      _
    $region13: #{tpu_custom_call.1} parent=1 // pred_fallthru
      _
    // Predicated region
    $region14: #{tpu_custom_call.1} parent=1 // pred_check
      _
    $region15: #{tpu_custom_call.1} parent=1 // pred_check_branch
      %27 = sbr.rel (0) target = $region17
    $region16: #{tpu_custom_call.1} parent=1 // pred_region
      %28 = dma.done [#allocation3], 256
    $region17: #{tpu_custom_call.1} parent=1 // pred_fallthru
      _
    %v29 = vld [vmem:[#allocation2] sm:$0xff]
    %v30 = vld [vmem:[#allocation2 + $0x8] sm:$0xff]
    %vm31 = vcmask 261120
    %v32 = vsel %vm31, %v29, 0.0
    %33 = vadd.xlane.f32.xlu0 %v32
    %v34 = vpop.xlane.xlu0 %33
    %v35 = vsel %vm31, %v30, 0.0
    %36 = vadd.xlane.f32.xlu0 %v35
    %v37 = vpop.xlane.xlu0 %36
    %v38 = vrcp.pop 32.0
    %v39 = vmul.f32 %v34, %v38
    %v40 = vmul.f32 %v37, %v38
    %v41 = vmul.f32 %v29, %v29
    %v42 = vmul.f32 %v30, %v30
    %v43 = vsel %vm31, %v41, 0.0
    %44 = vadd.xlane.f32.xlu0 %v43
    %v45 = vpop.xlane.xlu0 %44
    %v46 = vsel %vm31, %v42, 0.0
    %47 = vadd.xlane.f32.xlu0 %v46
    %v48 = vpop.xlane.xlu0 %47
    %v49 = vmul.f32 %v45, %v38
    %v50 = vmul.f32 %v48, %v38
    %v51 = vmul.f32 %v39, %v39
    %v52 = vmul.f32 %v40, %v40
    %v53 = vsub.f32 %v49, %v51
    %v54 = vsub.f32 %v50, %v52
    %v55 = vmax.f32 %v53, 0.0
    %v56 = vmax.f32 %v54, 0.0
    %v57 = vadd.f32 %v55, 1e-05
    %v58 = vadd.f32 %v56, 1e-05
    %v59 = vrsqrt.pop %v57
    %v60 = vrsqrt.pop %v58
    %v61 = vld [vmem:[%s1] sm:$0x1]
    %v62 = vld [vmem:[%s2] sm:$0x1]
    %v63 = vsub.f32 %v29, %v39
    %v64 = vsub.f32 %v30, %v40
    %v65 = vmul.f32 %v63, %v59
    %v66 = vmul.f32 %v64, %v60
    %v68 = vlaneseq
    %v69 = vshrl.u32 %v68, 7
    %v70 = vsub.s32 0, %v69
    %v71 = vrot.slane %v61, %v70
    %v73 = vmul.f32 %v65, %v71
    %v74 = vmul.f32 %v66, %v71
    %v76 = vlaneseq
    %v77 = vshrl.u32 %v76, 7
    %v78 = vsub.s32 0, %v77
    %v79 = vrot.slane %v62, %v78
    %v81 = vadd.f32 %v73, %v79
    %v82 = vadd.f32 %v74, %v79
    %83 = vst.msk [vmem:[#allocation5] sm:$0xff] %vm31, %v81
    %84 = vst.msk [vmem:[#allocation5 + $0x8] sm:$0xff] %vm31, %v82
    // Predicated region
    $region18: #{tpu_custom_call.1} parent=1 // pred_check
      _
    $region19: #{tpu_custom_call.1} parent=1 // pred_check_branch
      %86 = sbr.rel (0) target = $region21
    $region20: #{tpu_custom_call.1} parent=1 // pred_region
      %s88 = ssub.s32 256, 256
      %89 = vsyncadd [#allocation4], %s88
      %s90 = sshll.u32 [#allocation5], 4
      %s91 = int_to_ptr.vmem [resolvable:$true] %s90
      %96 = dma.vmem_to_hbm [thread:$0]  %s91, 256, %s3, [#allocation4], 128, 128, 8
    $region21: #{tpu_custom_call.1} parent=1 // pred_fallthru
      _
    // Predicated region
    $region22: #{tpu_custom_call.1} parent=1 // pred_check
      _
    $region23: #{tpu_custom_call.1} parent=1 // pred_check_branch
      %98 = sbr.rel (0) target = $region25
    $region24: #{tpu_custom_call.1} parent=1 // pred_region
      %99 = dma.done [#allocation4], 256
    $region25: #{tpu_custom_call.1} parent=1 // pred_fallthru
      _
    %100 = vsyncpa [#allocation3], 1
    %101 = vsyncpa [#allocation4], 1

</llo_original>
